<compile_context>
chip_gen: v6e
topology: v6e:2x2x1
jax: 0.10.0
libtpu: 0.0.40
codegen_flags: <defaults>
</compile_context>

<pallas_src>
import jax
import jax.numpy as jnp
from jax.experimental import pallas as pl
from jax.experimental.pallas import tpu as pltpu

_LANE = 128                      # vreg lane width
_SUBLANE = 8                     # vreg sublane count (f32)
_MAX_COLS = 1024                 # lane-dense slab width target (multiple of 128)
_MAX_BLOCK_BYTES = 16 * 1024 * 1024   # per-buffer ceiling on v5e/v6e
_MIN_BLOCK_BYTES = 512 * 1024


def _copy_kernel(x_ref, o_ref):
    # One lane/sublane-aligned tile resident in VMEM: straight copy.
    o_ref[...] = x_ref[...]


def _vmem_capacity_bytes():
    """Physical VMEM of the current generation; conservative (v7x) fallback."""
    try:
        return int(pltpu.get_tpu_info().vmem_capacity_bytes)
    except Exception:
        return 64 * 1024 * 1024


def _choose_cols(total):
    """Largest multiple-of-128 divisor of `total` (<= _MAX_COLS), preferring a
    sublane-aligned (multiple of 8) row count.  Caller guarantees total % 128 == 0,
    so this always succeeds (cols = 128 at worst)."""
    for f in range(_MAX_COLS, 0, -_LANE):
        if total % f == 0 and (total // f) % _SUBLANE == 0:
            return f
    for f in range(_MAX_COLS, 0, -_LANE):
        if total % f == 0:
            return f
    return _LANE  # unreachable given the precondition


def _tiled_copy_2d(x2d):
    """Pallas copy of a 2D lane-dense array, 1-D grid over rows with
    full-width (fully contiguous) blocks, generation-aware block sizing."""
    n_rows, n_cols = x2d.shape
    itemsize = jnp.dtype(x2d.dtype).itemsize

    vmem_cap = _vmem_capacity_bytes()
    # Per-buffer budget: 2 input + 2 output double buffers must fit with
    # headroom -> cap at vmem_cap/8 (8 MiB on v7x, 16 MiB on v5e/v6e).
    block_budget = min(_MAX_BLOCK_BYTES, max(_MIN_BLOCK_BYTES, vmem_cap // 8))

    row_bytes = n_cols * itemsize
    max_rows = max(_SUBLANE, block_budget // row_bytes)
    if n_rows <= max_rows:
        block_rows = n_rows                       # full extent: always legal
    else:
        block_rows = (max_rows // _SUBLANE) * _SUBLANE

    # Prefer >=2 row blocks so the parallel axis can shard across v7x's 2 TCs.
    if block_rows == n_rows and n_rows >= 2 * _SUBLANE:
        half = pl.cdiv(n_rows, 2)
        block_rows = ((half + _SUBLANE - 1) // _SUBLANE) * _SUBLANE

    grid = (pl.cdiv(n_rows, block_rows),)

    block_bytes = block_rows * n_cols * itemsize
    # Explicit scoped-VMEM limit: 4 buffers + headroom, never above physical.
    vmem_limit = int(min(vmem_cap,
                         max(32 * 1024 * 1024, 4 * block_bytes + 8 * 1024 * 1024)))

    total_bytes = n_rows * n_cols * itemsize
    return pl.pallas_call(
        _copy_kernel,
        out_shape=jax.ShapeDtypeStruct((n_rows, n_cols), x2d.dtype),
        grid=grid,
        in_specs=[pl.BlockSpec((block_rows, n_cols), lambda i: (i, 0))],
        out_specs=pl.BlockSpec((block_rows, n_cols), lambda i: (i, 0)),
        compiler_params=pltpu.CompilerParams(
            dimension_semantics=("parallel",),
            vmem_limit_bytes=vmem_limit),
        cost_estimate=pl.CostEstimate(
            flops=0, transcendentals=0, bytes_accessed=2 * total_bytes),
    )(x2d)


def flatten(x, n_batch_dims: int = 1, materialize: bool = False):
    """Pallas-backed equivalent of Flatten(n_batch_dims).forward(x).

    Default path (materialize=False) is a metadata-only reshape, matching the
    PyTorch .view semantics with zero HBM traffic.  materialize=True forces a
    physical copy through the Pallas tiled-copy kernel."""
    batch_shape = x.shape[:n_batch_dims]
    flat = 1
    for d in x.shape[n_batch_dims:]:
        flat *= d
    out_shape = (*batch_shape, flat)

    if not materialize:
        # Flatten is a view: no kernel, no copy.
        return x.reshape(out_shape)

    total = 1
    for d in x.shape:
        total *= d

    if total == 0 or total % _LANE != 0:
        # Hardened fallback: empty or non-lane-aligned element counts would
        # force masked partial stores; a plain jnp copy is faster and simpler.
        return jnp.copy(x).reshape(out_shape)

    cols = _choose_cols(total)
    rows = total // cols
    y2d = _tiled_copy_2d(x.reshape(rows, cols))
    return y2d.reshape(out_shape)


if __name__ == "__main__":
    key = jax.random.PRNGKey(0)
    B, C, H, W = 2, 4, 16, 16
    x = jax.random.normal(key, (B, C, H, W), dtype=jnp.float32)

    # Default (fast) path: pure metadata reshape, no kernel launch.
    y_view = flatten(x, n_batch_dims=1)

    # Materialized path: exercises the Pallas tiled-copy kernel once.
    y_copy = flatten(x, n_batch_dims=1, materialize=True)
    y_copy = jax.block_until_ready(y_copy)

    # Reference semantics: torch x.view(B, -1)  ==  row-major reshape.
    y_ref = x.reshape(B, -1)
    assert y_view.shape == (B, C * H * W), y_view.shape
    assert y_copy.shape == (B, C * H * W), y_copy.shape
    assert y_copy.dtype == x.dtype
    assert jnp.array_equal(y_view, y_ref), "view path mismatch vs reference"
    assert jnp.array_equal(y_copy, y_ref), "copy path mismatch vs reference"

    print("KERNEL_OK")
</pallas_src>

<mosaic_0001>
module attributes {stable_mosaic.version = 11 : i64} {
  func.func @_copy_kernel(%arg0: i32, %arg1: memref<8x256xf32, #tpu.memory_space<vmem>>, %arg2: memref<8x256xf32, #tpu.memory_space<vmem>>) attributes {dimension_semantics = [#tpu.dimension_semantics<parallel>], iteration_bounds = array<i64: 1>, scalar_prefetch = 0 : i64, scratch_operands = 0 : i64, tpu.core_type = #tpu.core_type<tc>, window_params = [{transform_indices = @transform_0, window_bounds = array<i64: 8, 256>}, {transform_indices = @transform_1, window_bounds = array<i64: 8, 256>}]} {
    %c0 = arith.constant 0 : index
    %c0_0 = arith.constant 0 : index
    %0 = vector.load %arg1[%c0, %c0_0] : memref<8x256xf32, #tpu.memory_space<vmem>>, vector<8x256xf32>
    %c0_1 = arith.constant 0 : index
    %c0_2 = arith.constant 0 : index
    %1 = vector.load %arg2[%c0_1, %c0_2] : memref<8x256xf32, #tpu.memory_space<vmem>>, vector<8x256xf32>
    tpu.vector_store %arg2[%c0_1, %c0_2], %0 {strides = array<i32>} : memref<8x256xf32, #tpu.memory_space<vmem>>, vector<8x256xf32>,
    return
  }
  func.func @transform_0(%arg0: i32) -> (i32, i32) {
    %c0_i32 = arith.constant 0 : i32
    %c0_i32_0 = arith.constant 0 : i32
    return %arg0, %c0_i32 : i32, i32
  }
  func.func @transform_1(%arg0: i32) -> (i32, i32) {
    %c0_i32 = arith.constant 0 : i32
    %c0_i32_0 = arith.constant 0 : i32
    return %arg0, %c0_i32 : i32, i32
  }
}

</mosaic_0001>

<llo_original>
// kernel: tpu_custom_call.1
$region0: #{tpu_custom_call.1}
  #allocation0 [shape = 'u32[]', space=smem, size = 0x4, offset = 0x4, fixed_abs, tag = 'smem constant byte address 0x4 - core index']
  #allocation1 [shape = 'u32[144,128]{1,0:T(1,128)}', space=vmem, size = 0x12000, scoped, tag = 'internal scratch']
  %s0 = inlined_call_operand.hbm [shape: f32[8,256], index: 0, kind: input, shape index: {}]
  %s1 = inlined_call_operand.hbm [shape: f32[8,256], index: 1, kind: output, shape index: {}]
  %s2 = sld [smem:[#allocation0]]
  $region18: #{tpu_custom_call.1} parent=0
    _
  %s4 = ssub.s32 1, %s2
  %s5 = scalar_select 0, %s4, %s2
  $region1: #{tpu_custom_call.1} parent=0
    #allocation2 [shape = 'u8[8192]{0}', space=vmem, size = 0x2000, scoped, tag = 'input window, operand 0, single buffered']
    #allocation3 [shape = 's32[1]{0}', space=sflag, size = 0x4, scoped, tag = 'scoped memory for tpu_custom_call.1']
    #allocation4 [shape = 's32[1]{0}', space=sflag, size = 0x4, scoped, tag = 'scoped memory for tpu_custom_call.1']
    #allocation5 [shape = 'u8[8192]{0}', space=vmem, size = 0x2000, scoped, tag = 'output window, operand 0, single buffered']
    %6 = vsyncpa [#allocation3], 0
    %7 = vsyncpa [#allocation4], 0
    // Predicated region
    $region2: #{tpu_custom_call.1} parent=1 // pred_check
      _
    $region3: #{tpu_custom_call.1} parent=1 // pred_check_branch
      %9 = sbr.rel (0) target = $region5
    $region4: #{tpu_custom_call.1} parent=1 // pred_region
      %s11 = ssub.s32 256, 256
      %12 = vsyncadd [#allocation3], %s11
      %s14 = sshll.u32 [#allocation2], 4
      %s15 = int_to_ptr.vmem [resolvable:$true] %s14
      %17 = dma.hbm_to_vmem [thread:$0]  %s0, 256, %s15, [#allocation3]
    $region5: #{tpu_custom_call.1} parent=1 // pred_fallthru
      _
    // Predicated region
    $region6: #{tpu_custom_call.1} parent=1 // pred_check
      _
    $region7: #{tpu_custom_call.1} parent=1 // pred_check_branch
      %19 = sbr.rel (0) target = $region9
    $region8: #{tpu_custom_call.1} parent=1 // pred_region
      %20 = dma.done [#allocation3], 256
    $region9: #{tpu_custom_call.1} parent=1 // pred_fallthru
      _
    %v21 = vld [vmem:[#allocation2] sm:$0xff]
    %v22 = vld [vmem:[#allocation2 + $0x8] sm:$0xff]
    %23 = vst [vmem:[#allocation5] sm:$0xff] %v21
    %24 = vst [vmem:[#allocation5 + $0x8] sm:$0xff] %v22
    // Predicated region
    $region10: #{tpu_custom_call.1} parent=1 // pred_check
      _
    $region11: #{tpu_custom_call.1} parent=1 // pred_check_branch
      %26 = sbr.rel (0) target = $region13
    $region12: #{tpu_custom_call.1} parent=1 // pred_region
      %s28 = ssub.s32 256, 256
      %29 = vsyncadd [#allocation4], %s28
      %s31 = sshll.u32 [#allocation5], 4
      %s32 = int_to_ptr.vmem [resolvable:$true] %s31
      %34 = dma.vmem_to_hbm [thread:$0]  %s32, 256, %s1, [#allocation4]
    $region13: #{tpu_custom_call.1} parent=1 // pred_fallthru
      _
    // Predicated region
    $region14: #{tpu_custom_call.1} parent=1 // pred_check
      _
    $region15: #{tpu_custom_call.1} parent=1 // pred_check_branch
      %36 = sbr.rel (0) target = $region17
    $region16: #{tpu_custom_call.1} parent=1 // pred_region
      %37 = dma.done [#allocation4], 256
    $region17: #{tpu_custom_call.1} parent=1 // pred_fallthru
      _
    %38 = vsyncpa [#allocation3], 1
    %39 = vsyncpa [#allocation4], 1

</llo_original>
